<compile_context>
chip_gen: v5e
topology: v5e:2x2
jax: 0.10.0
libtpu: 0.0.40
codegen_flags: <defaults>
</compile_context>

<pallas_src>
import jax
import jax.numpy as jnp
from jax.experimental import pallas as pl
from jax.experimental.pallas import tpu as pltpu

LANE = 128


def _round_up(x, m):
    return (x + m - 1) // m * m


def _make_mlp_softmax_kernel(num_hidden, out_size):
    """Fused (folded-BN) MLP + masked softmax kernel.

    Ref order: x, (W, b) * num_hidden, W_out, b_out, out.
    Weights are bf16, biases f32; accumulation and elementwise math in f32.
    """

    def kernel(*refs):
        x_ref = refs[0]
        out_ref = refs[-1]
        prm = refs[1:-1]

        h = x_ref[...]  # bf16 tile (batch_tile, n_total)
        for l in range(num_hidden):
            w_ref, b_ref = prm[2 * l], prm[2 * l + 1]
            # Linear on the MXU, f32 accumulate.
            a = jnp.dot(h, w_ref[...], preferred_element_type=jnp.float32)
            # Bias + ReLU in f32 (BN already folded into W/b offline).
            a = jnp.maximum(a + b_ref[...], 0.0)
            # Narrow back to bf16 only as the next MXU operand.
            h = a.astype(jnp.bfloat16)
            # Dropout: identity at inference.

        w_ref, b_ref = prm[2 * num_hidden], prm[2 * num_hidden + 1]
        logits = jnp.dot(h, w_ref[...], preferred_element_type=jnp.float32)
        logits = logits + b_ref[...]

        # Output is padded to a full 128-lane slab; mask pad lanes to -inf so
        # they contribute exp(-inf)=0 to the softmax denominator.
        lane = jax.lax.broadcasted_iota(jnp.int32, logits.shape, 1)
        logits = jnp.where(lane < out_size, logits, -jnp.inf)

        # Softmax over the feature axis (PyTorch nn.Softmax() on 2D -> dim=1).
        m = jnp.max(logits, axis=-1, keepdims=True)
        e = jnp.exp(logits - m)
        denom = jnp.sum(e, axis=-1, keepdims=True)
        out_ref[...] = (e * pl.reciprocal(denom, approx=True)).astype(out_ref.dtype)

    return kernel


def fold_and_pad_params(params, *, compute_dtype=jnp.bfloat16):
    """Fold eval-mode BN (scale/shift) into the next Linear, pad widths to 128.

    Input `params`: hidden layers {'w','b','scale','shift'} + final {'w','b'}.
    Returns a list of (W_padded[bf16], b_padded[f32]) pairs, one per Linear.
    """
    num_hidden = len(params) - 1
    folded = []
    pend_scale = None
    pend_shift = None
    for l in range(num_hidden):
        w = params[l]["w"].astype(jnp.float32)
        b = params[l]["b"].reshape(-1).astype(jnp.float32)
        if pend_scale is not None:
            b = b + pend_shift @ w          # absorb previous BN shift
            w = pend_scale[:, None] * w     # absorb previous BN scale
        folded.append((w, b))
        pend_scale = params[l]["scale"].reshape(-1).astype(jnp.float32)
        pend_shift = params[l]["shift"].reshape(-1).astype(jnp.float32)

    w = params[-1]["w"].astype(jnp.float32)
    b = params[-1]["b"].reshape(-1).astype(jnp.float32)
    if pend_scale is not None:
        b = b + pend_shift @ w
        w = pend_scale[:, None] * w
    folded.append((w, b))

    # Zero-pad: output dims to 128-lane multiples; input dims of layers >0 to
    # match the previous layer's padded output (x features stay unpadded).
    padded = []
    for i, (w, b) in enumerate(folded):
        in_dim, out_dim = w.shape
        in_pad = in_dim if i == 0 else _round_up(in_dim, LANE)
        out_pad = _round_up(out_dim, LANE)
        w_p = jnp.zeros((in_pad, out_pad), jnp.float32).at[:in_dim, :out_dim].set(w)
        b_p = jnp.zeros((1, out_pad), jnp.float32).at[0, :out_dim].set(b)
        padded.append((w_p.astype(compute_dtype), b_p))  # weights bf16, bias f32
    return padded


def tabular_modelemb_forward(x, params, *, out_size, batch_tile=256):
    """Fused forward pass.  `params` as produced by init_params()."""
    batch, n_total = x.shape
    assert batch_tile % 16 == 0, "batch_tile must be a multiple of 16 (bf16 tiling)"

    folded = fold_and_pad_params(params)
    num_hidden = len(folded) - 1
    out_pad = folded[-1][0].shape[1]          # 128-lane padded output width

    # Pad batch up to a multiple of batch_tile (padded rows sliced off below).
    batch_pad = _round_up(batch, batch_tile)
    x_in = x.astype(jnp.bfloat16)             # halve x DMA bytes
    if batch_pad != batch:
        x_in = jnp.zeros((batch_pad, n_total), jnp.bfloat16).at[:batch, :].set(x_in)

    kernel = _make_mlp_softmax_kernel(num_hidden, out_size)

    flat_params = []
    in_specs = [pl.BlockSpec((batch_tile, n_total), lambda i: (i, 0))]
    for w, b in folded:
        flat_params += [w, b]
        in_specs.append(pl.BlockSpec(w.shape, lambda i: (0, 0)))
        in_specs.append(pl.BlockSpec(b.shape, lambda i: (0, 0)))
    out_specs = pl.BlockSpec((batch_tile, out_pad), lambda i: (i, 0))

    fn = pl.pallas_call(
        kernel,
        out_shape=jax.ShapeDtypeStruct((batch_pad, out_pad), jnp.float32),
        grid_spec=pltpu.PrefetchScalarGridSpec(
            num_scalar_prefetch=0,
            grid=(batch_pad // batch_tile,),
            in_specs=in_specs,
            out_specs=out_specs,
        ),
        compiler_params=pltpu.CompilerParams(
            dimension_semantics=("parallel",),
            vmem_limit_bytes=32 * 1024 * 1024,  # explicit budget (v7x: 64 MiB phys)
        ),
    )
    out = fn(x_in, *flat_params)
    return out[:batch, :out_size]


def init_params(key, n_total, layers, out_size, eps=1e-5):
    """Deterministic parameter init matching the module's shapes.

    Linear: U(-1/sqrt(fan_in), 1/sqrt(fan_in)) (PyTorch default).
    BatchNorm1d: deterministic non-trivial gamma/beta/running stats, kept as
    per-feature scale/shift for the eval path (folded later).
    """
    params = []
    n_in = n_total
    for width in layers:
        key, kw, kb, kg, kbe, km, kv = jax.random.split(key, 7)
        bound = 1.0 / jnp.sqrt(jnp.float32(n_in))
        w = jax.random.uniform(kw, (n_in, width), jnp.float32, -bound, bound)
        b = jax.random.uniform(kb, (1, width), jnp.float32, -bound, bound)
        gamma = 1.0 + 0.1 * jax.random.normal(kg, (1, width), jnp.float32)
        beta = 0.1 * jax.random.normal(kbe, (1, width), jnp.float32)
        r_mean = 0.1 * jax.random.normal(km, (1, width), jnp.float32)
        r_var = 1.0 + 0.1 * jax.random.uniform(kv, (1, width), jnp.float32)
        scale = gamma / jnp.sqrt(r_var + eps)
        shift = beta - r_mean * scale
        params.append({"w": w, "b": b, "scale": scale, "shift": shift})
        n_in = width

    key, kw, kb = jax.random.split(key, 3)
    bound = 1.0 / jnp.sqrt(jnp.float32(n_in))
    w = jax.random.uniform(kw, (n_in, out_size), jnp.float32, -bound, bound)
    b = jax.random.uniform(kb, (1, out_size), jnp.float32, -bound, bound)
    params.append({"w": w, "b": b})
    return params


def reference_forward(x, params):
    """Pure-JAX f32 reference of the original (unfolded) eval-mode module."""
    h = x.astype(jnp.float32)
    for layer in params[:-1]:
        h = h @ layer["w"] + layer["b"]
        h = jnp.maximum(h, 0.0)
        h = h * layer["scale"] + layer["shift"]
    logits = h @ params[-1]["w"] + params[-1]["b"]
    return jax.nn.softmax(logits, axis=-1)


if __name__ == "__main__":
    # Small shapes consistent with the module (tabular batch of feature rows);
    # batch chosen so the default 256-row tile gives 2 grid steps.
    batch = 512
    n_total = 32          # already-concatenated embeddings + continuous feats
    hidden_layers = (64, 32)
    out_size = 8

    key = jax.random.PRNGKey(0)
    key, kx, kp = jax.random.split(key, 3)

    x = jax.random.normal(kx, (batch, n_total), dtype=jnp.float32)
    params = init_params(kp, n_total, hidden_layers, out_size)

    out = tabular_modelemb_forward(x, params, out_size=out_size, batch_tile=256)
    out = jax.block_until_ready(out)

    ref = jax.block_until_ready(reference_forward(x, params))
    assert out.shape == (batch, out_size)
    # bf16 MXU operands + approx reciprocal -> loosened tolerance vs f32 ref.
    assert jnp.allclose(out, ref, atol=2e-2), "mismatch vs reference"
    # Softmax rows sum to ~1.
    assert jnp.allclose(jnp.sum(out, axis=-1), 1.0, atol=1e-2)

    print("KERNEL_OK")
</pallas_src>

<mosaic_0001>
module attributes {stable_mosaic.version = 11 : i64} {
  func.func @kernel(%arg0: i32, %arg1: memref<256x32xbf16, #tpu.memory_space<vmem>>, %arg2: memref<32x128xbf16, #tpu.memory_space<vmem>>, %arg3: memref<1x128xf32, #tpu.memory_space<vmem>>, %arg4: memref<128x128xbf16, #tpu.memory_space<vmem>>, %arg5: memref<1x128xf32, #tpu.memory_space<vmem>>, %arg6: memref<128x128xbf16, #tpu.memory_space<vmem>>, %arg7: memref<1x128xf32, #tpu.memory_space<vmem>>, %arg8: memref<256x128xf32, #tpu.memory_space<vmem>>) attributes {dimension_semantics = [#tpu.dimension_semantics<parallel>], iteration_bounds = array<i64: 2>, scalar_prefetch = 0 : i64, scratch_operands = 0 : i64, tpu.core_type = #tpu.core_type<tc>, window_params = [{transform_indices = @transform_0, window_bounds = array<i64: 256, 32>}, {pipeline_mode = #tpu.pipeline_mode<synchronous>, transform_indices = @transform_1, window_bounds = array<i64: 32, 128>}, {pipeline_mode = #tpu.pipeline_mode<synchronous>, transform_indices = @transform_2, window_bounds = array<i64: 1, 128>}, {pipeline_mode = #tpu.pipeline_mode<synchronous>, transform_indices = @transform_3, window_bounds = array<i64: 128, 128>}, {pipeline_mode = #tpu.pipeline_mode<synchronous>, transform_indices = @transform_4, window_bounds = array<i64: 1, 128>}, {pipeline_mode = #tpu.pipeline_mode<synchronous>, transform_indices = @transform_5, window_bounds = array<i64: 128, 128>}, {pipeline_mode = #tpu.pipeline_mode<synchronous>, transform_indices = @transform_6, window_bounds = array<i64: 1, 128>}, {transform_indices = @transform_7, window_bounds = array<i64: 256, 128>}]} {
    %c0 = arith.constant 0 : index
    %c0_0 = arith.constant 0 : index
    %0 = vector.load %arg1[%c0, %c0_0] : memref<256x32xbf16, #tpu.memory_space<vmem>>, vector<256x32xbf16>
    %c0_1 = arith.constant 0 : index
    %c0_2 = arith.constant 0 : index
    %1 = vector.load %arg2[%c0_1, %c0_2] : memref<32x128xbf16, #tpu.memory_space<vmem>>, vector<32x128xbf16>
    %cst = arith.constant dense<0.000000e+00> : vector<256x128xf32>
    %2 = tpu.matmul %0, %1, %cst {dimension_numbers = #tpu.dot_dimension_numbers<[1], [0], [0], [1], [0, 0, 1, 1], [], []>} : vector<256x32xbf16>, vector<32x128xbf16>, vector<256x128xf32> -> vector<256x128xf32>
    %c0_3 = arith.constant 0 : index
    %c0_4 = arith.constant 0 : index
    %3 = vector.load %arg3[%c0_3, %c0_4] : memref<1x128xf32, #tpu.memory_space<vmem>>, vector<1x128xf32>
    %4 = vector.broadcast %3 : vector<1x128xf32> to vector<256x128xf32>
    %5 = arith.addf %2, %4 : vector<256x128xf32>
    %cst_5 = arith.constant 0.000000e+00 : f32
    %6 = vector.broadcast %cst_5 : f32 to vector<256x128xf32>
    %7 = arith.maximumf %5, %6 : vector<256x128xf32>
    %8 = arith.truncf %7 : vector<256x128xf32> to vector<256x128xbf16>
    %c0_6 = arith.constant 0 : index
    %c0_7 = arith.constant 0 : index
    %9 = vector.load %arg4[%c0_6, %c0_7] : memref<128x128xbf16, #tpu.memory_space<vmem>>, vector<128x128xbf16>
    %cst_8 = arith.constant dense<0.000000e+00> : vector<256x128xf32>
    %10 = tpu.matmul %8, %9, %cst_8 {dimension_numbers = #tpu.dot_dimension_numbers<[1], [0], [0], [1], [0, 0, 1, 1], [], []>} : vector<256x128xbf16>, vector<128x128xbf16>, vector<256x128xf32> -> vector<256x128xf32>
    %c0_9 = arith.constant 0 : index
    %c0_10 = arith.constant 0 : index
    %11 = vector.load %arg5[%c0_9, %c0_10] : memref<1x128xf32, #tpu.memory_space<vmem>>, vector<1x128xf32>
    %12 = vector.broadcast %11 : vector<1x128xf32> to vector<256x128xf32>
    %13 = arith.addf %10, %12 : vector<256x128xf32>
    %cst_11 = arith.constant 0.000000e+00 : f32
    %14 = vector.broadcast %cst_11 : f32 to vector<256x128xf32>
    %15 = arith.maximumf %13, %14 : vector<256x128xf32>
    %16 = arith.truncf %15 : vector<256x128xf32> to vector<256x128xbf16>
    %c0_12 = arith.constant 0 : index
    %c0_13 = arith.constant 0 : index
    %17 = vector.load %arg6[%c0_12, %c0_13] : memref<128x128xbf16, #tpu.memory_space<vmem>>, vector<128x128xbf16>
    %cst_14 = arith.constant dense<0.000000e+00> : vector<256x128xf32>
    %18 = tpu.matmul %16, %17, %cst_14 {dimension_numbers = #tpu.dot_dimension_numbers<[1], [0], [0], [1], [0, 0, 1, 1], [], []>} : vector<256x128xbf16>, vector<128x128xbf16>, vector<256x128xf32> -> vector<256x128xf32>
    %c0_15 = arith.constant 0 : index
    %c0_16 = arith.constant 0 : index
    %19 = vector.load %arg7[%c0_15, %c0_16] : memref<1x128xf32, #tpu.memory_space<vmem>>, vector<1x128xf32>
    %20 = vector.broadcast %19 : vector<1x128xf32> to vector<256x128xf32>
    %21 = arith.addf %18, %20 : vector<256x128xf32>
    %22 = tpu.iota {dimensions = array<i32: 1>} : vector<256x128xi32>
    %c8_i32 = arith.constant 8 : i32
    %23 = vector.broadcast %c8_i32 : i32 to vector<256x128xi32>
    %24 = arith.cmpi slt, %22, %23 : vector<256x128xi32>
    %cst_17 = arith.constant 0xFF800000 : f32
    %25 = vector.broadcast %cst_17 : f32 to vector<256x128xf32>
    %26 = arith.select %24, %21, %25 : vector<256x128xi1>, vector<256x128xf32>
    %cst_18 = arith.constant dense<0xFF800000> : vector<256xf32>
    %27 = vector.multi_reduction <maximumf>, %26, %cst_18 [1] : vector<256x128xf32> to vector<256xf32>
    %28 = vector.shape_cast %27 : vector<256xf32> to vector<256x1xf32>
    %29 = vector.broadcast %28 : vector<256x1xf32> to vector<256x128xf32>
    %30 = arith.subf %26, %29 : vector<256x128xf32>
    %31 = math.exp %30 : vector<256x128xf32>
    %cst_19 = arith.constant dense<0.000000e+00> : vector<256xf32>
    %32 = vector.multi_reduction <add>, %31, %cst_19 [1] : vector<256x128xf32> to vector<256xf32>
    %33 = vector.shape_cast %32 : vector<256xf32> to vector<256x1xf32>
    %34 = tpu.reciprocal %33 {approx = true} : vector<256x1xf32> -> vector<256x1xf32>
    %35 = vector.broadcast %34 : vector<256x1xf32> to vector<256x128xf32>
    %36 = arith.mulf %31, %35 : vector<256x128xf32>
    %c0_20 = arith.constant 0 : index
    %c0_21 = arith.constant 0 : index
    %37 = vector.load %arg8[%c0_20, %c0_21] : memref<256x128xf32, #tpu.memory_space<vmem>>, vector<256x128xf32>
    tpu.vector_store %arg8[%c0_20, %c0_21], %36 {strides = array<i32>} : memref<256x128xf32, #tpu.memory_space<vmem>>, vector<256x128xf32>,
    return
  }
  func.func @transform_0(%arg0: i32) -> (i32, i32) {
    %c0_i32 = arith.constant 0 : i32
    %c0_i32_0 = arith.constant 0 : i32
    return %arg0, %c0_i32 : i32, i32
  }
  func.func @transform_1(%arg0: i32) -> (i32, i32) {
    %c0_i32 = arith.constant 0 : i32
    %c0_i32_0 = arith.constant 0 : i32
    %c0_i32_1 = arith.constant 0 : i32
    return %c0_i32, %c0_i32_0 : i32, i32
  }
  func.func @transform_2(%arg0: i32) -> (i32, i32) {
    %c0_i32 = arith.constant 0 : i32
    %c0_i32_0 = arith.constant 0 : i32
    %c0_i32_1 = arith.constant 0 : i32
    return %c0_i32, %c0_i32_0 : i32, i32
  }
  func.func @transform_3(%arg0: i32) -> (i32, i32) {
    %c0_i32 = arith.constant 0 : i32
    %c0_i32_0 = arith.constant 0 : i32
    %c0_i32_1 = arith.constant 0 : i32
    return %c0_i32, %c0_i32_0 : i32, i32
  }
  func.func @transform_4(%arg0: i32) -> (i32, i32) {
    %c0_i32 = arith.constant 0 : i32
    %c0_i32_0 = arith.constant 0 : i32
    %c0_i32_1 = arith.constant 0 : i32
    return %c0_i32, %c0_i32_0 : i32, i32
  }
  func.func @transform_5(%arg0: i32) -> (i32, i32) {
    %c0_i32 = arith.constant 0 : i32
    %c0_i32_0 = arith.constant 0 : i32
    %c0_i32_1 = arith.constant 0 : i32
    return %c0_i32, %c0_i32_0 : i32, i32
  }
  func.func @transform_6(%arg0: i32) -> (i32, i32) {
    %c0_i32 = arith.constant 0 : i32
    %c0_i32_0 = arith.constant 0 : i32
    %c0_i32_1 = arith.constant 0 : i32
    return %c0_i32, %c0_i32_0 : i32, i32
  }
  func.func @transform_7(%arg0: i32) -> (i32, i32) {
    %c0_i32 = arith.constant 0 : i32
    %c0_i32_0 = arith.constant 0 : i32
    return %arg0, %c0_i32 : i32, i32
  }
}

</mosaic_0001>

<llo_original>
// kernel: tpu_custom_call.1
$region0: #{tpu_custom_call.1}
  #allocation0 [shape = 'u32[]', space=smem, size = 0x4, offset = 0x4, fixed_abs, tag = 'smem constant byte address 0x4 - core index']
  #allocation1 [shape = 'u32[72,128]{1,0:T(1,128)}', space=vmem, size = 0x9000, scoped, tag = 'internal scratch']
  %s0 = inlined_call_operand.vmem [shape: bf16[512,32], index: 0, kind: input, shape index: {}]
  %s1 = inlined_call_operand.vmem [shape: bf16[32,128], index: 1, kind: input, shape index: {}]
  %s2 = inlined_call_operand.vmem [shape: f32[1,128], index: 2, kind: input, shape index: {}]
  %s3 = inlined_call_operand.vmem [shape: bf16[128,128], index: 3, kind: input, shape index: {}]
  %s4 = inlined_call_operand.vmem [shape: f32[1,128], index: 4, kind: input, shape index: {}]
  %s5 = inlined_call_operand.vmem [shape: bf16[128,128], index: 5, kind: input, shape index: {}]
  %s6 = inlined_call_operand.vmem [shape: f32[1,128], index: 6, kind: input, shape index: {}]
  %s7 = inlined_call_operand.hbm [shape: f32[512,128], index: 7, kind: output, shape index: {}]
  %s8 = sld [smem:[#allocation0]]
  $region61: #{tpu_custom_call.1} parent=0
    _
  %s10 = ssub.s32 1, %s8
  %s11 = scalar_select 0, %s10, %s8
  $region1: #{tpu_custom_call.1} parent=0
    #allocation2 [shape = 'u8[262144]{0}', space=vmem, size = 0x40000, scoped, tag = 'output window, operand 0']
    #allocation3 [shape = 's32[2]{0}', space=sflag, size = 0x8, scoped, tag = 'scoped memory for tpu_custom_call.1']
    %12 = vsyncpa [#allocation3], 0
    %s13 = scalar_lea.sflag [#allocation3], 1
    %14 = vsyncpa %s13, 0
    loop: start=0, step=1, limit=4
    $region2: #{tpu_custom_call.1} parent=1 // loop_pre_header
      _
    $region3: #{tpu_custom_call.1} parent=1 // loop_header
      %s16 = sphi 0, %s20
      %p17 = scmp.ge.s32.totalorder %s16, 4
      %s26 = sphi 0, %s28
      %s29 = sphi 0, %s26
      %s30 = sphi 0, %s29
      %s46 = sphi 0, %s30
      %s50 = sphi 0, %s50
      %s52 = sphi 0, %s50
      %s53 = sphi 0, %s52
      %s67 = sphi 0, %s53
      %s71 = sphi 0, %s71
      %s73 = sphi 0, %s71
      %s74 = sphi 0, %s73
      %s88 = sphi 0, %s74
      %s92 = sphi 0, %s92
      %s94 = sphi 0, %s92
      %s95 = sphi 0, %s94
      %s109 = sphi 0, %s95
      %s113 = sphi 0, %s113
      %s115 = sphi 0, %s113
      %s116 = sphi 0, %s115
      %s130 = sphi 0, %s116
      %s134 = sphi 0, %s134
      %s136 = sphi 0, %s134
      %s137 = sphi 0, %s136
      %s151 = sphi 0, %s137
      %s155 = sphi 0, %s155
      %s157 = sphi 0, %s155
      %s158 = sphi 0, %s157
      %s172 = sphi 0, %s158
      %s178 = sphi 0, %s180
      %s181 = sphi 0, %s178
      %s182 = sphi 0, %s181
      %s198 = sphi 0, %s182
    $region4: #{tpu_custom_call.1} parent=1 // loop_header_branch
      %19 = sbr.rel (%p17) target = $region8
    $region5: #{tpu_custom_call.1} parent=1 // loop_body
      %s21 = ssub.s32 %s16, 1
      %s22 = ssub.s32 %s16, 2
      %s23 = sadd.s32 %s16, 1
      %s24 = ssub.s32 %s16, %s23
      %p25 = scmp.eq.s32.totalorder %s24, 0
      %s27 = sadd.s32 %s26, 1
      %s28 = scalar_select %p25, %s26, %s27
      %p31 = pneg %p25
      %p32 = scmp.eq.s32.totalorder %s16, 1
      %p33 = por %p31, %p32
      %p34 = scmp.ne.s32.totalorder %s26, %s29
      %p35 = scmp.eq.s32.totalorder %s16, 0
      %p36 = por %p34, %p35
      %p37 = scmp.ne.s32.totalorder %s26, %s29
      %p38 = scmp.eq.s32.totalorder %s21, 1
      %p39 = por %p37, %p38
      %p40 = scmp.ne.s32.totalorder %s29, %s30
      %p41 = scmp.eq.s32.totalorder %s21, 0
      %p42 = por %p40, %p41
      %p43 = scmp.ne.s32.totalorder %s29, %s30
      %p44 = scmp.eq.s32.totalorder %s22, 1
      %p45 = por %p43, %p44
      %p47 = scmp.ne.s32.totalorder %s30, %s46
      %p48 = scmp.eq.s32.totalorder %s22, 0
      %p49 = por %p47, %p48
      %s51 = sadd.s32 %s50, 1
      %p54 = scmp.eq.s32.totalorder %s16, 1
      %p55 = scmp.ne.s32.totalorder %s50, %s52
      %p56 = scmp.eq.s32.totalorder %s16, 0
      %p57 = por %p55, %p56
      %p58 = scmp.ne.s32.totalorder %s50, %s52
      %p59 = scmp.eq.s32.totalorder %s21, 1
      %p60 = por %p58, %p59
      %p61 = scmp.ne.s32.totalorder %s52, %s53
      %p62 = scmp.eq.s32.totalorder %s21, 0
      %p63 = por %p61, %p62
      %p64 = scmp.ne.s32.totalorder %s52, %s53
      %p65 = scmp.eq.s32.totalorder %s22, 1
      %p66 = por %p64, %p65
      %p68 = scmp.ne.s32.totalorder %s53, %s67
      %p69 = scmp.eq.s32.totalorder %s22, 0
      %p70 = por %p68, %p69
      %s72 = sadd.s32 %s71, 1
      %p75 = scmp.eq.s32.totalorder %s16, 1
      %p76 = scmp.ne.s32.totalorder %s71, %s73
      %p77 = scmp.eq.s32.totalorder %s16, 0
      %p78 = por %p76, %p77
      %p79 = scmp.ne.s32.totalorder %s71, %s73
      %p80 = scmp.eq.s32.totalorder %s21, 1
      %p81 = por %p79, %p80
      %p82 = scmp.ne.s32.totalorder %s73, %s74
      %p83 = scmp.eq.s32.totalorder %s21, 0
      %p84 = por %p82, %p83
      %p85 = scmp.ne.s32.totalorder %s73, %s74
      %p86 = scmp.eq.s32.totalorder %s22, 1
      %p87 = por %p85, %p86
      %p89 = scmp.ne.s32.totalorder %s74, %s88
      %p90 = scmp.eq.s32.totalorder %s22, 0
      %p91 = por %p89, %p90
      %s93 = sadd.s32 %s92, 1
      %p96 = scmp.eq.s32.totalorder %s16, 1
      %p97 = scmp.ne.s32.totalorder %s92, %s94
      %p98 = scmp.eq.s32.totalorder %s16, 0
      %p99 = por %p97, %p98
      %p100 = scmp.ne.s32.totalorder %s92, %s94
      %p101 = scmp.eq.s32.totalorder %s21, 1
      %p102 = por %p100, %p101
      %p103 = scmp.ne.s32.totalorder %s94, %s95
      %p104 = scmp.eq.s32.totalorder %s21, 0
      %p105 = por %p103, %p104
      %p106 = scmp.ne.s32.totalorder %s94, %s95
      %p107 = scmp.eq.s32.totalorder %s22, 1
      %p108 = por %p106, %p107
      %p110 = scmp.ne.s32.totalorder %s95, %s109
      %p111 = scmp.eq.s32.totalorder %s22, 0
      %p112 = por %p110, %p111
      %s114 = sadd.s32 %s113, 1
      %p117 = scmp.eq.s32.totalorder %s16, 1
      %p118 = scmp.ne.s32.totalorder %s113, %s115
      %p119 = scmp.eq.s32.totalorder %s16, 0
      %p120 = por %p118, %p119
      %p121 = scmp.ne.s32.totalorder %s113, %s115
      %p122 = scmp.eq.s32.totalorder %s21, 1
      %p123 = por %p121, %p122
      %p124 = scmp.ne.s32.totalorder %s115, %s116
      %p125 = scmp.eq.s32.totalorder %s21, 0
      %p126 = por %p124, %p125
      %p127 = scmp.ne.s32.totalorder %s115, %s116
      %p128 = scmp.eq.s32.totalorder %s22, 1
      %p129 = por %p127, %p128
      %p131 = scmp.ne.s32.totalorder %s116, %s130
      %p132 = scmp.eq.s32.totalorder %s22, 0
      %p133 = por %p131, %p132
      %s135 = sadd.s32 %s134, 1
      %p138 = scmp.eq.s32.totalorder %s16, 1
      %p139 = scmp.ne.s32.totalorder %s134, %s136
      %p140 = scmp.eq.s32.totalorder %s16, 0
      %p141 = por %p139, %p140
      %p142 = scmp.ne.s32.totalorder %s134, %s136
      %p143 = scmp.eq.s32.totalorder %s21, 1
      %p144 = por %p142, %p143
      %p145 = scmp.ne.s32.totalorder %s136, %s137
      %p146 = scmp.eq.s32.totalorder %s21, 0
      %p147 = por %p145, %p146
      %p148 = scmp.ne.s32.totalorder %s136, %s137
      %p149 = scmp.eq.s32.totalorder %s22, 1
      %p150 = por %p148, %p149
      %p152 = scmp.ne.s32.totalorder %s137, %s151
      %p153 = scmp.eq.s32.totalorder %s22, 0
      %p154 = por %p152, %p153
      %s156 = sadd.s32 %s155, 1
      %p159 = scmp.eq.s32.totalorder %s16, 1
      %p160 = scmp.ne.s32.totalorder %s155, %s157
      %p161 = scmp.eq.s32.totalorder %s16, 0
      %p162 = por %p160, %p161
      %p163 = scmp.ne.s32.totalorder %s155, %s157
      %p164 = scmp.eq.s32.totalorder %s21, 1
      %p165 = por %p163, %p164
      %p166 = scmp.ne.s32.totalorder %s157, %s158
      %p167 = scmp.eq.s32.totalorder %s21, 0
      %p168 = por %p166, %p167
      %p169 = scmp.ne.s32.totalorder %s157, %s158
      %p170 = scmp.eq.s32.totalorder %s22, 1
      %p171 = por %p169, %p170
      %p173 = scmp.ne.s32.totalorder %s158, %s172
      %p174 = scmp.eq.s32.totalorder %s22, 0
      %p175 = por %p173, %p174
      %s176 = ssub.s32 %s16, %s23
      %p177 = scmp.eq.s32.totalorder %s176, 0
      %s179 = sadd.s32 %s178, 1
      %s180 = scalar_select %p177, %s178, %s179
      %p183 = pneg %p177
      %p184 = scmp.eq.s32.totalorder %s16, 1
      %p185 = por %p183, %p184
      %p186 = scmp.ne.s32.totalorder %s178, %s181
      %p187 = scmp.eq.s32.totalorder %s16, 0
      %p188 = por %p186, %p187
      %p189 = scmp.ne.s32.totalorder %s178, %s181
      %p190 = scmp.eq.s32.totalorder %s21, 1
      %p191 = por %p189, %p190
      %p192 = scmp.ne.s32.totalorder %s181, %s182
      %p193 = scmp.eq.s32.totalorder %s21, 0
      %p194 = por %p192, %p193
      %p195 = scmp.ne.s32.totalorder %s181, %s182
      %p196 = scmp.eq.s32.totalorder %s22, 1
      %p197 = por %p195, %p196
      %p199 = scmp.ne.s32.totalorder %s182, %s198
      %p200 = scmp.eq.s32.totalorder %s22, 0
      %p201 = por %p199, %p200
      %p202 = scmp.le.s32.totalorder 1, %s16
      %p203 = scmp.lt.s32.totalorder %s16, 3
      %p204 = pnand %p202, %p203
      %p205 = pneg %p204
      // Predicated region
      $region9: #{tpu_custom_call.1} parent=5 // pred_check
        _
      $region10: #{tpu_custom_call.1} parent=5 // pred_check_branch
        %207 = sbr.rel (%p204) target = $region12
      $region11: #{tpu_custom_call.1} parent=5 // pred_region
        %s208 = ssub.s32 %s16, 1
        // Predicated region
        $region13: #{tpu_custom_call.1} parent=11 // pred_check
          %p209 = pneg %p63
        $region14: #{tpu_custom_call.1} parent=11 // pred_check_branch
          %211 = sbr.rel (%p209) target = $region16
        $region15: #{tpu_custom_call.1} parent=11 // pred_region
          _
        $region16: #{tpu_custom_call.1} parent=11 // pred_fallthru
          _
        // Predicated region
        $region17: #{tpu_custom_call.1} parent=11 // pred_check
          %p212 = pneg %p84
        $region18: #{tpu_custom_call.1} parent=11 // pred_check_branch
          %214 = sbr.rel (%p212) target = $region20
        $region19: #{tpu_custom_call.1} parent=11 // pred_region
          _
        $region20: #{tpu_custom_call.1} parent=11 // pred_fallthru
          _
        // Predicated region
        $region21: #{tpu_custom_call.1} parent=11 // pred_check
          %p215 = pneg %p105
        $region22: #{tpu_custom_call.1} parent=11 // pred_check_branch
          %217 = sbr.rel (%p215) target = $region24
        $region23: #{tpu_custom_call.1} parent=11 // pred_region
          _
        $region24: #{tpu_custom_call.1} parent=11 // pred_fallthru
          _
        // Predicated region
        $region25: #{tpu_custom_call.1} parent=11 // pred_check
          %p218 = pneg %p126
        $region26: #{tpu_custom_call.1} parent=11 // pred_check_branch
          %220 = sbr.rel (%p218) target = $region28
        $region27: #{tpu_custom_call.1} parent=11 // pred_region
          _
        $region28: #{tpu_custom_call.1} parent=11 // pred_fallthru
          _
        // Predicated region
        $region29: #{tpu_custom_call.1} parent=11 // pred_check
          %p221 = pneg %p147
        $region30: #{tpu_custom_call.1} parent=11 // pred_check_branch
          %223 = sbr.rel (%p221) target = $region32
        $region31: #{tpu_custom_call.1} parent=11 // pred_region
          _
        $region32: #{tpu_custom_call.1} parent=11 // pred_fallthru
          _
        // Predicated region
        $region33: #{tpu_custom_call.1} parent=11 // pred_check
          %p224 = pneg %p168
        $region34: #{tpu_custom_call.1} parent=11 // pred_check_branch
          %226 = sbr.rel (%p224) target = $region36
        $region35: #{tpu_custom_call.1} parent=11 // pred_region
          _
        $region36: #{tpu_custom_call.1} parent=11 // pred_fallthru
          _
      $region12: #{tpu_custom_call.1} parent=5 // pred_fallthru
        _
      %p227 = scmp.lt.s32.totalorder %s16, 2
      // Predicated region
      $region37: #{tpu_custom_call.1} parent=5 // pred_check
        %p228 = pneg %p227
      $region38: #{tpu_custom_call.1} parent=5 // pred_check_branch
        %230 = sbr.rel (%p228) target = $region40
      $region39: #{tpu_custom_call.1} parent=5 // pred_region
        // Predicated region
        $region41: #{tpu_custom_call.1} parent=39 // pred_check
          %p231 = pneg %p36
        $region42: #{tpu_custom_call.1} parent=39 // pred_check_branch
          %233 = sbr.rel (%p231) target = $region44
        $region43: #{tpu_custom_call.1} parent=39 // pred_region
          %s234 = smul.u32 32, %s16
          %p235 = scmp.lt.s32.totalorder %s234, 63
          %s236 = scalar_select %p235, %s234, 63
          %s237 = smul.addr %s236, 4
          %s238 = scalar_lea.vmem %s0, %s237
          %s239 = smul.u32 32, %s16
        $region44: #{tpu_custom_call.1} parent=39 // pred_fallthru
          _
      $region40: #{tpu_custom_call.1} parent=5 // pred_fallthru
        _
      %p240 = scmp.le.s32.totalorder 1, %s16
      %p241 = scmp.lt.s32.totalorder %s16, 3
      %p242 = pnand %p240, %p241
      %p243 = pneg %p242
      // Predicated region
      $region45: #{tpu_custom_call.1} parent=5 // pred_check
        _
      $region46: #{tpu_custom_call.1} parent=5 // pred_check_branch
        %245 = sbr.rel (%p242) target = $region48
      $region47: #{tpu_custom_call.1} parent=5 // pred_region
        %s246 = ssub.s32 %s16, 1
        %s247 = smul.u32 32, %s21
        %p248 = scmp.lt.s32.totalorder %s247, 63
        %s249 = scalar_select %p248, %s247, 63
        %s250 = smul.addr %s249, 4
        %s251 = scalar_lea.vmem %s0, %s250
        %p252 = pneg %p42
        %p253 = pneg %p39
        %p254 = pneg %p63
        %p255 = pneg %p60
        %p256 = pneg %p84
        %p257 = pneg %p81
        %p258 = pneg %p105
        %p259 = pneg %p102
        %p260 = pneg %p126
        %p261 = pneg %p123
        %p262 = pneg %p147
        %p263 = pneg %p144
        %p264 = pneg %p168
        %p265 = pneg %p165
        %p266 = pneg %p194
        %p267 = pneg %p191
        %s268 = sand.u32 %s181, 1
        %s269 = scalar_lea.sflag [#allocation3], %s268
        %s270 = sand.u32 %s181, 1
        %s271 = smul.addr %s270, 256
        %s272 = scalar_lea.vmem [#allocation2], %s271
        %s273 = smul.u32 32, %s21
        %p274 = scmp.lt.s32.totalorder %s273, 63
        %s275 = scalar_select %p274, %s273, 63
        %s276 = smul.addr %s275, 4
        %s277 = scalar_lea.vmem %s0, %s276
        %s278 = smul.u32 32, %s21
        %s279 = smul.u32 32, %s21
        %v281 = vld [vmem:[%s277] sm:$0xf]
        %v282 = vld [vmem:[%s277 + $0x4] sm:$0xf]
        %v283 = vld [vmem:[%s277 + $0x8] sm:$0xf]
        %v284 = vld [vmem:[%s277 + $0xc] sm:$0xf]
        %v285 = vld [vmem:[%s277 + $0x10] sm:$0xf]
        %v286 = vld [vmem:[%s277 + $0x14] sm:$0xf]
        %v287 = vld [vmem:[%s277 + $0x18] sm:$0xf]
        %v288 = vld [vmem:[%s277 + $0x1c] sm:$0xf]
        %v289 = vld [vmem:[%s277 + $0x20] sm:$0xf]
        %v290 = vld [vmem:[%s277 + $0x24] sm:$0xf]
        %v291 = vld [vmem:[%s277 + $0x28] sm:$0xf]
        %v292 = vld [vmem:[%s277 + $0x2c] sm:$0xf]
        %v293 = vld [vmem:[%s277 + $0x30] sm:$0xf]
        %v294 = vld [vmem:[%s277 + $0x34] sm:$0xf]
        %v295 = vld [vmem:[%s277 + $0x38] sm:$0xf]
        %v296 = vld [vmem:[%s277 + $0x3c] sm:$0xf]
        %v297 = vld [vmem:[%s277 + $0x40] sm:$0xf]
        %v298 = vld [vmem:[%s277 + $0x44] sm:$0xf]
        %v299 = vld [vmem:[%s277 + $0x48] sm:$0xf]
        %v300 = vld [vmem:[%s277 + $0x4c] sm:$0xf]
        %v301 = vld [vmem:[%s277 + $0x50] sm:$0xf]
        %v302 = vld [vmem:[%s277 + $0x54] sm:$0xf]
        %v303 = vld [vmem:[%s277 + $0x58] sm:$0xf]
        %v304 = vld [vmem:[%s277 + $0x5c] sm:$0xf]
        %v305 = vld [vmem:[%s277 + $0x60] sm:$0xf]
        %v306 = vld [vmem:[%s277 + $0x64] sm:$0xf]
        %v307 = vld [vmem:[%s277 + $0x68] sm:$0xf]
        %v308 = vld [vmem:[%s277 + $0x6c] sm:$0xf]
        %v309 = vld [vmem:[%s277 + $0x70] sm:$0xf]
        %v310 = vld [vmem:[%s277 + $0x74] sm:$0xf]
        %v311 = vld [vmem:[%s277 + $0x78] sm:$0xf]
        %v312 = vld [vmem:[%s277 + $0x7c] sm:$0xf]
        %v313 = vld [vmem:[%s1] sm:$0xf]
        %v314 = vld [vmem:[%s1 + $0x4] sm:$0xf]
        %v315 = vld [vmem:[%s1 + $0x8] sm:$0xf]
        %v316 = vld [vmem:[%s1 + $0xc] sm:$0xf]
        %v317 = vld [vmem:[%s2] sm:$0x1]
        %v319 = vperm.slane %v317, 0
        %v353 = vunpack.c.l.b16 %v281
        %v354 = vunpack.c.l.b16 %v282
        %v355 = vunpack.c.l.b16 %v283
        %v356 = vunpack.c.l.b16 %v284
        %v357 = vunpack.c.l.b16 %v285
        %v358 = vunpack.c.l.b16 %v286
        %v359 = vunpack.c.l.b16 %v287
        %v360 = vunpack.c.l.b16 %v288
        %v361 = vunpack.c.l.b16 %v289
        %v362 = vunpack.c.l.b16 %v290
        %v363 = vunpack.c.l.b16 %v291
        %v364 = vunpack.c.l.b16 %v292
        %v365 = vunpack.c.l.b16 %v293
        %v366 = vunpack.c.l.b16 %v294
        %v367 = vunpack.c.l.b16 %v295
        %v368 = vunpack.c.l.b16 %v296
        %v369 = vunpack.c.l.b16 %v297
        %v370 = vunpack.c.l.b16 %v298
        %v371 = vunpack.c.l.b16 %v299
        %v372 = vunpack.c.l.b16 %v300
        %v373 = vunpack.c.l.b16 %v301
        %v374 = vunpack.c.l.b16 %v302
        %v375 = vunpack.c.l.b16 %v303
        %v376 = vunpack.c.l.b16 %v304
        %v377 = vunpack.c.l.b16 %v305
        %v378 = vunpack.c.l.b16 %v306
        %v379 = vunpack.c.l.b16 %v307
        %v380 = vunpack.c.l.b16 %v308
        %v381 = vunpack.c.l.b16 %v309
        %v382 = vunpack.c.l.b16 %v310
        %v383 = vunpack.c.l.b16 %v311
        %v384 = vunpack.c.l.b16 %v312
        %v385 = vpack.c.b16 %v354, %v353
        %v386 = vpack.c.b16 %v356, %v355
        %v387 = vpack.c.b16 %v358, %v357
        %v388 = vpack.c.b16 %v360, %v359
        %v389 = vpack.c.b16 %v362, %v361
        %v390 = vpack.c.b16 %v364, %v363
        %v391 = vpack.c.b16 %v366, %v365
        %v392 = vpack.c.b16 %v368, %v367
        %v393 = vpack.c.b16 %v370, %v369
        %v394 = vpack.c.b16 %v372, %v371
        %v395 = vpack.c.b16 %v374, %v373
        %v396 = vpack.c.b16 %v376, %v375
        %v397 = vpack.c.b16 %v378, %v377
        %v398 = vpack.c.b16 %v380, %v379
        %v399 = vpack.c.b16 %v382, %v381
        %v400 = vpack.c.b16 %v384, %v383
        %v405 = vunpack.c.l.b16 %v313
        %v406 = vunpack.c.l.b16 %v314
        %v407 = vunpack.c.l.b16 %v315
        %v408 = vunpack.c.l.b16 %v316
        %v409 = vpack.c.b16 %v406, %v405
        %v410 = vpack.c.b16 %v408, %v407
        %vm413 = vcmask 261120
        %v415 = vsel %vm413, %v385, 0
        %v418 = vsel %vm413, %v386, 0
        %v421 = vsel %vm413, %v387, 0
        %v424 = vsel %vm413, %v388, 0
        %v427 = vsel %vm413, %v389, 0
        %v430 = vsel %vm413, %v390, 0
        %v433 = vsel %vm413, %v391, 0
        %v436 = vsel %vm413, %v392, 0
        %v439 = vsel %vm413, %v393, 0
        %v442 = vsel %vm413, %v394, 0
        %v445 = vsel %vm413, %v395, 0
        %v448 = vsel %vm413, %v396, 0
        %v451 = vsel %vm413, %v397, 0
        %v454 = vsel %vm413, %v398, 0
        %v457 = vsel %vm413, %v399, 0
        %v460 = vsel %vm413, %v400, 0
        %462 = vmatpush.bf16.msra.mxu0 0
        %463 = vmatpush.bf16.msra.mxu0 0
        %464 = vmatpush.bf16.msra.mxu0 0
        %465 = vmatpush.bf16.msra.mxu0 0
        %466 = vmatpush.bf16.msra.mxu0 0
        %467 = vmatpush.bf16.msra.mxu0 0
        %468 = vmatpush.bf16.msra.mxu0 %v410
        %469 = vmatpush.bf16.msra.mxu0 %v409
        %470 = vmatmul.bf16.gmra.mxu0 %v415
        %v471 = vpop.f32.mrf.mxu0
        %v472 = vadd.f32 %v319, %v471
        %v473 = vpop.f32.mrf.mxu0
        %v474 = vadd.f32 %v319, %v473
        %475 = vmatmul.bf16.gmra.mxu0 %v418
        %v476 = vpop.f32.mrf.mxu0
        %v477 = vadd.f32 %v319, %v476
        %v478 = vpop.f32.mrf.mxu0
        %v479 = vadd.f32 %v319, %v478
        %480 = vmatmul.bf16.gmra.mxu0 %v421
        %v481 = vpop.f32.mrf.mxu0
        %v482 = vadd.f32 %v319, %v481
        %v483 = vpop.f32.mrf.mxu0
        %v484 = vadd.f32 %v319, %v483
        %485 = vmatmul.bf16.gmra.mxu0 %v424
        %v486 = vpop.f32.mrf.mxu0
        %v487 = vadd.f32 %v319, %v486
        %v488 = vpop.f32.mrf.mxu0
        %v489 = vadd.f32 %v319, %v488
        %490 = vmatmul.bf16.gmra.mxu0 %v427
        %v491 = vpop.f32.mrf.mxu0
        %v492 = vadd.f32 %v319, %v491
        %v493 = vpop.f32.mrf.mxu0
        %v494 = vadd.f32 %v319, %v493
        %495 = vmatmul.bf16.gmra.mxu0 %v430
        %v496 = vpop.f32.mrf.mxu0
        %v497 = vadd.f32 %v319, %v496
        %v498 = vpop.f32.mrf.mxu0
        %v499 = vadd.f32 %v319, %v498
        %500 = vmatmul.bf16.gmra.mxu0 %v433
        %v501 = vpop.f32.mrf.mxu0
        %v502 = vadd.f32 %v319, %v501
        %v503 = vpop.f32.mrf.mxu0
        %v504 = vadd.f32 %v319, %v503
        %505 = vmatmul.bf16.gmra.mxu0 %v436
        %v506 = vpop.f32.mrf.mxu0
        %v507 = vadd.f32 %v319, %v506
        %v508 = vpop.f32.mrf.mxu0
        %v509 = vadd.f32 %v319, %v508
        %510 = vmatmul.bf16.gmra.mxu0 %v439
        %v511 = vpop.f32.mrf.mxu0
        %v512 = vadd.f32 %v319, %v511
        %v513 = vpop.f32.mrf.mxu0
        %v514 = vadd.f32 %v319, %v513
        %515 = vmatmul.bf16.gmra.mxu0 %v442
        %v516 = vpop.f32.mrf.mxu0
        %v517 = vadd.f32 %v319, %v516
        %v518 = vpop.f32.mrf.mxu0
        %v519 = vadd.f32 %v319, %v518
        %520 = vmatmul.bf16.gmra.mxu0 %v445
        %v521 = vpop.f32.mrf.mxu0
        %v522 = vadd.f32 %v319, %v521
        %v523 = vpop.f32.mrf.mxu0
        %v524 = vadd.f32 %v319, %v523
        %525 = vmatmul.bf16.gmra.mxu0 %v448
        %v526 = vpop.f32.mrf.mxu0
        %v527 = vadd.f32 %v319, %v526
        %v528 = vpop.f32.mrf.mxu0
        %v529 = vadd.f32 %v319, %v528
        %530 = vmatmul.bf16.gmra.mxu0 %v451
        %v531 = vpop.f32.mrf.mxu0
        %v532 = vadd.f32 %v319, %v531
        %v533 = vpop.f32.mrf.mxu0
        %v534 = vadd.f32 %v319, %v533
        %535 = vmatmul.bf16.gmra.mxu0 %v454
        %v536 = vpop.f32.mrf.mxu0
        %v537 = vadd.f32 %v319, %v536
        %v538 = vpop.f32.mrf.mxu0
        %v539 = vadd.f32 %v319, %v538
        %540 = vmatmul.bf16.gmra.mxu0 %v457
        %v541 = vpop.f32.mrf.mxu0
        %v542 = vadd.f32 %v319, %v541
        %v543 = vpop.f32.mrf.mxu0
        %v544 = vadd.f32 %v319, %v543
        %545 = vmatmul.bf16.gmra.mxu0 %v460
        %v546 = vpop.f32.mrf.mxu0
        %v547 = vadd.f32 %v319, %v546
        %v548 = vpop.f32.mrf.mxu0
        %v549 = vadd.f32 %v319, %v548
        %550 = vdwg.mxu0
        %v551 = vmax.f32 %v472, 0.0
        %v552 = vmax.f32 %v474, 0.0
        %v553 = vmax.f32 %v477, 0.0
        %v554 = vmax.f32 %v479, 0.0
        %v555 = vmax.f32 %v482, 0.0
        %v556 = vmax.f32 %v484, 0.0
        %v557 = vmax.f32 %v487, 0.0
        %v558 = vmax.f32 %v489, 0.0
        %v559 = vmax.f32 %v492, 0.0
        %v560 = vmax.f32 %v494, 0.0
        %v561 = vmax.f32 %v497, 0.0
        %v562 = vmax.f32 %v499, 0.0
        %v563 = vmax.f32 %v502, 0.0
        %v564 = vmax.f32 %v504, 0.0
        %v565 = vmax.f32 %v507, 0.0
        %v566 = vmax.f32 %v509, 0.0
        %v567 = vmax.f32 %v512, 0.0
        %v568 = vmax.f32 %v514, 0.0
        %v569 = vmax.f32 %v517, 0.0
        %v570 = vmax.f32 %v519, 0.0
        %v571 = vmax.f32 %v522, 0.0
        %v572 = vmax.f32 %v524, 0.0
        %v573 = vmax.f32 %v527, 0.0
        %v574 = vmax.f32 %v529, 0.0
        %v575 = vmax.f32 %v532, 0.0
        %v576 = vmax.f32 %v534, 0.0
        %v577 = vmax.f32 %v537, 0.0
        %v578 = vmax.f32 %v539, 0.0
        %v579 = vmax.f32 %v542, 0.0
        %v580 = vmax.f32 %v544, 0.0
        %v581 = vmax.f32 %v547, 0.0
        %v582 = vmax.f32 %v549, 0.0
        %v583 = vpack.c.bf16 %v552, %v551
        %v584 = vpack.c.bf16 %v554, %v553
        %v585 = vpack.c.bf16 %v556, %v555
        %v586 = vpack.c.bf16 %v558, %v557
        %v587 = vpack.c.bf16 %v560, %v559
        %v588 = vpack.c.bf16 %v562, %v561
        %v589 = vpack.c.bf16 %v564, %v563
        %v590 = vpack.c.bf16 %v566, %v565
        %v591 = vpack.c.bf16 %v568, %v567
        %v592 = vpack.c.bf16 %v570, %v569
        %v593 = vpack.c.bf16 %v572, %v571
        %v594 = vpack.c.bf16 %v574, %v573
        %v595 = vpack.c.bf16 %v576, %v575
        %v596 = vpack.c.bf16 %v578, %v577
        %v597 = vpack.c.bf16 %v580, %v579
        %v598 = vpack.c.bf16 %v582, %v581
        %v599 = vld [vmem:[%s3] sm:$0xf]
        %v600 = vld [vmem:[%s3 + $0x4] sm:$0xf]
        %v601 = vld [vmem:[%s3 + $0x8] sm:$0xf]
        %v602 = vld [vmem:[%s3 + $0xc] sm:$0xf]
        %v603 = vld [vmem:[%s3 + $0x10] sm:$0xf]
        %v604 = vld [vmem:[%s3 + $0x14] sm:$0xf]
        %v605 = vld [vmem:[%s3 + $0x18] sm:$0xf]
        %v606 = vld [vmem:[%s3 + $0x1c] sm:$0xf]
        %v607 = vld [vmem:[%s3 + $0x20] sm:$0xf]
        %v608 = vld [vmem:[%s3 + $0x24] sm:$0xf]
        %v609 = vld [vmem:[%s3 + $0x28] sm:$0xf]
        %v610 = vld [vmem:[%s3 + $0x2c] sm:$0xf]
        %v611 = vld [vmem:[%s3 + $0x30] sm:$0xf]
        %v612 = vld [vmem:[%s3 + $0x34] sm:$0xf]
        %v613 = vld [vmem:[%s3 + $0x38] sm:$0xf]
        %v614 = vld [vmem:[%s3 + $0x3c] sm:$0xf]
        %v615 = vld [vmem:[%s4] sm:$0x1]
        %v617 = vperm.slane %v615, 0
        %v635 = vunpack.c.l.b16 %v599
        %v636 = vunpack.c.l.b16 %v600
        %v637 = vunpack.c.l.b16 %v601
        %v638 = vunpack.c.l.b16 %v602
        %v639 = vunpack.c.l.b16 %v603
        %v640 = vunpack.c.l.b16 %v604
        %v641 = vunpack.c.l.b16 %v605
        %v642 = vunpack.c.l.b16 %v606
        %v643 = vunpack.c.l.b16 %v607
        %v644 = vunpack.c.l.b16 %v608
        %v645 = vunpack.c.l.b16 %v609
        %v646 = vunpack.c.l.b16 %v610
        %v647 = vunpack.c.l.b16 %v611
        %v648 = vunpack.c.l.b16 %v612
        %v649 = vunpack.c.l.b16 %v613
        %v650 = vunpack.c.l.b16 %v614
        %v651 = vpack.c.b16 %v636, %v635
        %v652 = vpack.c.b16 %v638, %v637
        %v653 = vpack.c.b16 %v640, %v639
        %v654 = vpack.c.b16 %v642, %v641
        %v655 = vpack.c.b16 %v644, %v643
        %v656 = vpack.c.b16 %v646, %v645
        %v657 = vpack.c.b16 %v648, %v647
        %v658 = vpack.c.b16 %v650, %v649
        %667 = vmatpush.bf16.msra.mxu0 %v658
        %668 = vmatpush.bf16.msra.mxu0 %v657
        %669 = vmatpush.bf16.msra.mxu0 %v656
        %670 = vmatpush.bf16.msra.mxu0 %v655
        %671 = vmatpush.bf16.msra.mxu0 %v654
        %672 = vmatpush.bf16.msra.mxu0 %v653
        %673 = vmatpush.bf16.msra.mxu0 %v652
        %674 = vmatpush.bf16.msra.mxu0 %v651
        %675 = vmatmul.bf16.gmra.mxu0 %v583
        %v676 = vpop.f32.mrf.mxu0
        %v677 = vadd.f32 %v617, %v676
        %v678 = vpop.f32.mrf.mxu0
        %v679 = vadd.f32 %v617, %v678
        %680 = vmatmul.bf16.gmra.mxu0 %v584
        %v681 = vpop.f32.mrf.mxu0
        %v682 = vadd.f32 %v617, %v681
        %v683 = vpop.f32.mrf.mxu0
        %v684 = vadd.f32 %v617, %v683
        %685 = vmatmul.bf16.gmra.mxu0 %v585
        %v686 = vpop.f32.mrf.mxu0
        %v687 = vadd.f32 %v617, %v686
        %v688 = vpop.f32.mrf.mxu0
        %v689 = vadd.f32 %v617, %v688
        %690 = vmatmul.bf16.gmra.mxu0 %v586
        %v691 = vpop.f32.mrf.mxu0
        %v692 = vadd.f32 %v617, %v691
        %v693 = vpop.f32.mrf.mxu0
        %v694 = vadd.f32 %v617, %v693
        %695 = vmatmul.bf16.gmra.mxu0 %v587
        %v696 = vpop.f32.mrf.mxu0
        %v697 = vadd.f32 %v617, %v696
        %v698 = vpop.f32.mrf.mxu0
        %v699 = vadd.f32 %v617, %v698
        %700 = vmatmul.bf16.gmra.mxu0 %v588
        %v701 = vpop.f32.mrf.mxu0
        %v702 = vadd.f32 %v617, %v701
        %v703 = vpop.f32.mrf.mxu0
        %v704 = vadd.f32 %v617, %v703
        %705 = vmatmul.bf16.gmra.mxu0 %v589
        %v706 = vpop.f32.mrf.mxu0
        %v707 = vadd.f32 %v617, %v706
        %v708 = vpop.f32.mrf.mxu0
        %v709 = vadd.f32 %v617, %v708
        %710 = vmatmul.bf16.gmra.mxu0 %v590
        %v711 = vpop.f32.mrf.mxu0
        %v712 = vadd.f32 %v617, %v711
        %v713 = vpop.f32.mrf.mxu0
        %v714 = vadd.f32 %v617, %v713
        %715 = vmatmul.bf16.gmra.mxu0 %v591
        %v716 = vpop.f32.mrf.mxu0
        %v717 = vadd.f32 %v617, %v716
        %v718 = vpop.f32.mrf.mxu0
        %v719 = vadd.f32 %v617, %v718
        %720 = vmatmul.bf16.gmra.mxu0 %v592
        %v721 = vpop.f32.mrf.mxu0
        %v722 = vadd.f32 %v617, %v721
        %v723 = vpop.f32.mrf.mxu0
        %v724 = vadd.f32 %v617, %v723
        %725 = vmatmul.bf16.gmra.mxu0 %v593
        %v726 = vpop.f32.mrf.mxu0
        %v727 = vadd.f32 %v617, %v726
        %v728 = vpop.f32.mrf.mxu0
        %v729 = vadd.f32 %v617, %v728
        %730 = vmatmul.bf16.gmra.mxu0 %v594
        %v731 = vpop.f32.mrf.mxu0
        %v732 = vadd.f32 %v617, %v731
        %v733 = vpop.f32.mrf.mxu0
        %v734 = vadd.f32 %v617, %v733
        %735 = vmatmul.bf16.gmra.mxu0 %v595
        %v736 = vpop.f32.mrf.mxu0
        %v737 = vadd.f32 %v617, %v736
        %v738 = vpop.f32.mrf.mxu0
        %v739 = vadd.f32 %v617, %v738
        %740 = vmatmul.bf16.gmra.mxu0 %v596
        %v741 = vpop.f32.mrf.mxu0
        %v742 = vadd.f32 %v617, %v741
        %v743 = vpop.f32.mrf.mxu0
        %v744 = vadd.f32 %v617, %v743
        %745 = vmatmul.bf16.gmra.mxu0 %v597
        %v746 = vpop.f32.mrf.mxu0
        %v747 = vadd.f32 %v617, %v746
        %v748 = vpop.f32.mrf.mxu0
        %v749 = vadd.f32 %v617, %v748
        %750 = vmatmul.bf16.gmra.mxu0 %v598
        %v751 = vpop.f32.mrf.mxu0
        %v752 = vadd.f32 %v617, %v751
        %v753 = vpop.f32.mrf.mxu0
        %v754 = vadd.f32 %v617, %v753
        %755 = vdwg.mxu0
        %v756 = vmax.f32 %v677, 0.0
        %v757 = vmax.f32 %v679, 0.0
        %v758 = vmax.f32 %v682, 0.0
        %v759 = vmax.f32 %v684, 0.0
        %v760 = vmax.f32 %v687, 0.0
        %v761 = vmax.f32 %v689, 0.0
        %v762 = vmax.f32 %v692, 0.0
        %v763 = vmax.f32 %v694, 0.0
        %v764 = vmax.f32 %v697, 0.0
        %v765 = vmax.f32 %v699, 0.0
        %v766 = vmax.f32 %v702, 0.0
        %v767 = vmax.f32 %v704, 0.0
        %v768 = vmax.f32 %v707, 0.0
        %v769 = vmax.f32 %v709, 0.0
        %v770 = vmax.f32 %v712, 0.0
        %v771 = vmax.f32 %v714, 0.0
        %v772 = vmax.f32 %v717, 0.0
        %v773 = vmax.f32 %v719, 0.0
        %v774 = vmax.f32 %v722, 0.0
        %v775 = vmax.f32 %v724, 0.0
        %v776 = vmax.f32 %v727, 0.0
        %v777 = vmax.f32 %v729, 0.0
        %v778 = vmax.f32 %v732, 0.0
        %v779 = vmax.f32 %v734, 0.0
        %v780 = vmax.f32 %v737, 0.0
        %v781 = vmax.f32 %v739, 0.0
        %v782 = vmax.f32 %v742, 0.0
        %v783 = vmax.f32 %v744, 0.0
        %v784 = vmax.f32 %v747, 0.0
        %v785 = vmax.f32 %v749, 0.0
        %v786 = vmax.f32 %v752, 0.0
        %v787 = vmax.f32 %v754, 0.0
        %v788 = vpack.c.bf16 %v757, %v756
        %v789 = vpack.c.bf16 %v759, %v758
        %v790 = vpack.c.bf16 %v761, %v760
        %v791 = vpack.c.bf16 %v763, %v762
        %v792 = vpack.c.bf16 %v765, %v764
        %v793 = vpack.c.bf16 %v767, %v766
        %v794 = vpack.c.bf16 %v769, %v768
        %v795 = vpack.c.bf16 %v771, %v770
        %v796 = vpack.c.bf16 %v773, %v772
        %v797 = vpack.c.bf16 %v775, %v774
        %v798 = vpack.c.bf16 %v777, %v776
        %v799 = vpack.c.bf16 %v779, %v778
        %v800 = vpack.c.bf16 %v781, %v780
        %v801 = vpack.c.bf16 %v783, %v782
        %v802 = vpack.c.bf16 %v785, %v784
        %v803 = vpack.c.bf16 %v787, %v786
        %v804 = vld [vmem:[%s5] sm:$0xf]
        %v805 = vld [vmem:[%s5 + $0x4] sm:$0xf]
        %v806 = vld [vmem:[%s5 + $0x8] sm:$0xf]
        %v807 = vld [vmem:[%s5 + $0xc] sm:$0xf]
        %v808 = vld [vmem:[%s5 + $0x10] sm:$0xf]
        %v809 = vld [vmem:[%s5 + $0x14] sm:$0xf]
        %v810 = vld [vmem:[%s5 + $0x18] sm:$0xf]
        %v811 = vld [vmem:[%s5 + $0x1c] sm:$0xf]
        %v812 = vld [vmem:[%s5 + $0x20] sm:$0xf]
        %v813 = vld [vmem:[%s5 + $0x24] sm:$0xf]
        %v814 = vld [vmem:[%s5 + $0x28] sm:$0xf]
        %v815 = vld [vmem:[%s5 + $0x2c] sm:$0xf]
        %v816 = vld [vmem:[%s5 + $0x30] sm:$0xf]
        %v817 = vld [vmem:[%s5 + $0x34] sm:$0xf]
        %v818 = vld [vmem:[%s5 + $0x38] sm:$0xf]
        %v819 = vld [vmem:[%s5 + $0x3c] sm:$0xf]
        %v820 = vld [vmem:[%s6] sm:$0x1]
        %v822 = vperm.slane %v820, 0
        %v840 = vunpack.c.l.b16 %v804
        %v841 = vunpack.c.l.b16 %v805
        %v842 = vunpack.c.l.b16 %v806
        %v843 = vunpack.c.l.b16 %v807
        %v844 = vunpack.c.l.b16 %v808
        %v845 = vunpack.c.l.b16 %v809
        %v846 = vunpack.c.l.b16 %v810
        %v847 = vunpack.c.l.b16 %v811
        %v848 = vunpack.c.l.b16 %v812
        %v849 = vunpack.c.l.b16 %v813
        %v850 = vunpack.c.l.b16 %v814
        %v851 = vunpack.c.l.b16 %v815
        %v852 = vunpack.c.l.b16 %v816
        %v853 = vunpack.c.l.b16 %v817
        %v854 = vunpack.c.l.b16 %v818
        %v855 = vunpack.c.l.b16 %v819
        %v856 = vpack.c.b16 %v841, %v840
        %v857 = vpack.c.b16 %v843, %v842
        %v858 = vpack.c.b16 %v845, %v844
        %v859 = vpack.c.b16 %v847, %v846
        %v860 = vpack.c.b16 %v849, %v848
        %v861 = vpack.c.b16 %v851, %v850
        %v862 = vpack.c.b16 %v853, %v852
        %v863 = vpack.c.b16 %v855, %v854
        %872 = vmatpush.bf16.msra.mxu0 %v863
        %873 = vmatpush.bf16.msra.mxu0 %v862
        %874 = vmatpush.bf16.msra.mxu0 %v861
        %875 = vmatpush.bf16.msra.mxu0 %v860
        %876 = vmatpush.bf16.msra.mxu0 %v859
        %877 = vmatpush.bf16.msra.mxu0 %v858
        %878 = vmatpush.bf16.msra.mxu0 %v857
        %879 = vmatpush.bf16.msra.mxu0 %v856
        %880 = vmatmul.bf16.gmra.mxu0 %v788
        %v881 = vpop.f32.mrf.mxu0
        %v882 = vadd.f32 %v822, %v881
        %v883 = vpop.f32.mrf.mxu0
        %v884 = vadd.f32 %v822, %v883
        %885 = vmatmul.bf16.gmra.mxu0 %v789
        %v886 = vpop.f32.mrf.mxu0
        %v887 = vadd.f32 %v822, %v886
        %v888 = vpop.f32.mrf.mxu0
        %v889 = vadd.f32 %v822, %v888
        %890 = vmatmul.bf16.gmra.mxu0 %v790
        %v891 = vpop.f32.mrf.mxu0
        %v892 = vadd.f32 %v822, %v891
        %v893 = vpop.f32.mrf.mxu0
        %v894 = vadd.f32 %v822, %v893
        %895 = vmatmul.bf16.gmra.mxu0 %v791
        %v896 = vpop.f32.mrf.mxu0
        %v897 = vadd.f32 %v822, %v896
        %v898 = vpop.f32.mrf.mxu0
        %v899 = vadd.f32 %v822, %v898
        %900 = vmatmul.bf16.gmra.mxu0 %v792
        %v901 = vpop.f32.mrf.mxu0
        %v902 = vadd.f32 %v822, %v901
        %v903 = vpop.f32.mrf.mxu0
        %v904 = vadd.f32 %v822, %v903
        %905 = vmatmul.bf16.gmra.mxu0 %v793
        %v906 = vpop.f32.mrf.mxu0
        %v907 = vadd.f32 %v822, %v906
        %v908 = vpop.f32.mrf.mxu0
        %v909 = vadd.f32 %v822, %v908
        %910 = vmatmul.bf16.gmra.mxu0 %v794
        %v911 = vpop.f32.mrf.mxu0
        %v912 = vadd.f32 %v822, %v911
        %v913 = vpop.f32.mrf.mxu0
        %v914 = vadd.f32 %v822, %v913
        %915 = vmatmul.bf16.gmra.mxu0 %v795
        %v916 = vpop.f32.mrf.mxu0
        %v917 = vadd.f32 %v822, %v916
        %v918 = vpop.f32.mrf.mxu0
        %v919 = vadd.f32 %v822, %v918
        %920 = vmatmul.bf16.gmra.mxu0 %v796
        %v921 = vpop.f32.mrf.mxu0
        %v922 = vadd.f32 %v822, %v921
        %v923 = vpop.f32.mrf.mxu0
        %v924 = vadd.f32 %v822, %v923
        %925 = vmatmul.bf16.gmra.mxu0 %v797
        %v926 = vpop.f32.mrf.mxu0
        %v927 = vadd.f32 %v822, %v926
        %v928 = vpop.f32.mrf.mxu0
        %v929 = vadd.f32 %v822, %v928
        %930 = vmatmul.bf16.gmra.mxu0 %v798
        %v931 = vpop.f32.mrf.mxu0
        %v932 = vadd.f32 %v822, %v931
        %v933 = vpop.f32.mrf.mxu0
        %v934 = vadd.f32 %v822, %v933
        %935 = vmatmul.bf16.gmra.mxu0 %v799
        %v936 = vpop.f32.mrf.mxu0
        %v937 = vadd.f32 %v822, %v936
        %v938 = vpop.f32.mrf.mxu0
        %v939 = vadd.f32 %v822, %v938
        %940 = vmatmul.bf16.gmra.mxu0 %v800
        %v941 = vpop.f32.mrf.mxu0
        %v942 = vadd.f32 %v822, %v941
        %v943 = vpop.f32.mrf.mxu0
        %v944 = vadd.f32 %v822, %v943
        %945 = vmatmul.bf16.gmra.mxu0 %v801
        %v946 = vpop.f32.mrf.mxu0
        %v947 = vadd.f32 %v822, %v946
        %v948 = vpop.f32.mrf.mxu0
        %v949 = vadd.f32 %v822, %v948
        %950 = vmatmul.bf16.gmra.mxu0 %v802
        %v951 = vpop.f32.mrf.mxu0
        %v952 = vadd.f32 %v822, %v951
        %v953 = vpop.f32.mrf.mxu0
        %v954 = vadd.f32 %v822, %v953
        %955 = vmatmul.bf16.gmra.mxu0 %v803
        %v956 = vpop.f32.mrf.mxu0
        %v957 = vadd.f32 %v822, %v956
        %v958 = vpop.f32.mrf.mxu0
        %v959 = vadd.f32 %v822, %v958
        %960 = vdwg.mxu0
        %v961 = vlaneseq
        %v962 = vand.u32 %v961, 127
        %vm963 = vcmp.lt.s32.totalorder %v962, 8
        %v964 = vsel %vm963, %v882, -inf
        %v965 = vsel %vm963, %v884, -inf
        %v966 = vsel %vm963, %v887, -inf
        %v967 = vsel %vm963, %v889, -inf
        %v968 = vsel %vm963, %v892, -inf
        %v969 = vsel %vm963, %v894, -inf
        %v970 = vsel %vm963, %v897, -inf
        %v971 = vsel %vm963, %v899, -inf
        %v972 = vsel %vm963, %v902, -inf
        %v973 = vsel %vm963, %v904, -inf
        %v974 = vsel %vm963, %v907, -inf
        %v975 = vsel %vm963, %v909, -inf
        %v976 = vsel %vm963, %v912, -inf
        %v977 = vsel %vm963, %v914, -inf
        %v978 = vsel %vm963, %v917, -inf
        %v979 = vsel %vm963, %v919, -inf
        %v980 = vsel %vm963, %v922, -inf
        %v981 = vsel %vm963, %v924, -inf
        %v982 = vsel %vm963, %v927, -inf
        %v983 = vsel %vm963, %v929, -inf
        %v984 = vsel %vm963, %v932, -inf
        %v985 = vsel %vm963, %v934, -inf
        %v986 = vsel %vm963, %v937, -inf
        %v987 = vsel %vm963, %v939, -inf
        %v988 = vsel %vm963, %v942, -inf
        %v989 = vsel %vm963, %v944, -inf
        %v990 = vsel %vm963, %v947, -inf
        %v991 = vsel %vm963, %v949, -inf
        %v992 = vsel %vm963, %v952, -inf
        %v993 = vsel %vm963, %v954, -inf
        %v994 = vsel %vm963, %v957, -inf
        %v995 = vsel %vm963, %v959, -inf
        %996 = vmax.xlane.f32.xlu0 %v964
        %v997 = vpop.xlane.xlu0 %996
        %998 = vmax.xlane.f32.xlu0 %v965
        %v999 = vpop.xlane.xlu0 %998
        %1000 = vmax.xlane.f32.xlu0 %v966
        %v1001 = vpop.xlane.xlu0 %1000
        %1002 = vmax.xlane.f32.xlu0 %v967
        %v1003 = vpop.xlane.xlu0 %1002
        %1004 = vmax.xlane.f32.xlu0 %v968
        %v1005 = vpop.xlane.xlu0 %1004
        %1006 = vmax.xlane.f32.xlu0 %v969
        %v1007 = vpop.xlane.xlu0 %1006
        %1008 = vmax.xlane.f32.xlu0 %v970
        %v1009 = vpop.xlane.xlu0 %1008
        %1010 = vmax.xlane.f32.xlu0 %v971
        %v1011 = vpop.xlane.xlu0 %1010
        %1012 = vmax.xlane.f32.xlu0 %v972
        %v1013 = vpop.xlane.xlu0 %1012
        %1014 = vmax.xlane.f32.xlu0 %v973
        %v1015 = vpop.xlane.xlu0 %1014
        %1016 = vmax.xlane.f32.xlu0 %v974
        %v1017 = vpop.xlane.xlu0 %1016
        %1018 = vmax.xlane.f32.xlu0 %v975
        %v1019 = vpop.xlane.xlu0 %1018
        %1020 = vmax.xlane.f32.xlu0 %v976
        %v1021 = vpop.xlane.xlu0 %1020
        %1022 = vmax.xlane.f32.xlu0 %v977
        %v1023 = vpop.xlane.xlu0 %1022
        %1024 = vmax.xlane.f32.xlu0 %v978
        %v1025 = vpop.xlane.xlu0 %1024
        %1026 = vmax.xlane.f32.xlu0 %v979
        %v1027 = vpop.xlane.xlu0 %1026
        %1028 = vmax.xlane.f32.xlu0 %v980
        %v1029 = vpop.xlane.xlu0 %1028
        %1030 = vmax.xlane.f32.xlu0 %v981
        %v1031 = vpop.xlane.xlu0 %1030
        %1032 = vmax.xlane.f32.xlu0 %v982
        %v1033 = vpop.xlane.xlu0 %1032
        %1034 = vmax.xlane.f32.xlu0 %v983
        %v1035 = vpop.xlane.xlu0 %1034
        %1036 = vmax.xlane.f32.xlu0 %v984
        %v1037 = vpop.xlane.xlu0 %1036
        %1038 = vmax.xlane.f32.xlu0 %v985
        %v1039 = vpop.xlane.xlu0 %1038
        %1040 = vmax.xlane.f32.xlu0 %v986
        %v1041 = vpop.xlane.xlu0 %1040
        %1042 = vmax.xlane.f32.xlu0 %v987
        %v1043 = vpop.xlane.xlu0 %1042
        %1044 = vmax.xlane.f32.xlu0 %v988
        %v1045 = vpop.xlane.xlu0 %1044
        %1046 = vmax.xlane.f32.xlu0 %v989
        %v1047 = vpop.xlane.xlu0 %1046
        %1048 = vmax.xlane.f32.xlu0 %v990
        %v1049 = vpop.xlane.xlu0 %1048
        %1050 = vmax.xlane.f32.xlu0 %v991
        %v1051 = vpop.xlane.xlu0 %1050
        %1052 = vmax.xlane.f32.xlu0 %v992
        %v1053 = vpop.xlane.xlu0 %1052
        %1054 = vmax.xlane.f32.xlu0 %v993
        %v1055 = vpop.xlane.xlu0 %1054
        %1056 = vmax.xlane.f32.xlu0 %v994
        %v1057 = vpop.xlane.xlu0 %1056
        %1058 = vmax.xlane.f32.xlu0 %v995
        %v1059 = vpop.xlane.xlu0 %1058
        %v1060 = vsub.f32 %v964, %v997
        %v1061 = vsub.f32 %v965, %v999
        %v1062 = vsub.f32 %v966, %v1001
        %v1063 = vsub.f32 %v967, %v1003
        %v1064 = vsub.f32 %v968, %v1005
        %v1065 = vsub.f32 %v969, %v1007
        %v1066 = vsub.f32 %v970, %v1009
        %v1067 = vsub.f32 %v971, %v1011
        %v1068 = vsub.f32 %v972, %v1013
        %v1069 = vsub.f32 %v973, %v1015
        %v1070 = vsub.f32 %v974, %v1017
        %v1071 = vsub.f32 %v975, %v1019
        %v1072 = vsub.f32 %v976, %v1021
        %v1073 = vsub.f32 %v977, %v1023
        %v1074 = vsub.f32 %v978, %v1025
        %v1075 = vsub.f32 %v979, %v1027
        %v1076 = vsub.f32 %v980, %v1029
        %v1077 = vsub.f32 %v981, %v1031
        %v1078 = vsub.f32 %v982, %v1033
        %v1079 = vsub.f32 %v983, %v1035
        %v1080 = vsub.f32 %v984, %v1037
        %v1081 = vsub.f32 %v985, %v1039
        %v1082 = vsub.f32 %v986, %v1041
        %v1083 = vsub.f32 %v987, %v1043
        %v1084 = vsub.f32 %v988, %v1045
        %v1085 = vsub.f32 %v989, %v1047
        %v1086 = vsub.f32 %v990, %v1049
        %v1087 = vsub.f32 %v991, %v1051
        %v1088 = vsub.f32 %v992, %v1053
        %v1089 = vsub.f32 %v993, %v1055
        %v1090 = vsub.f32 %v994, %v1057
        %v1091 = vsub.f32 %v995, %v1059
        %v1092 = vmul.f32 %v1060, 1.442695
        %v1093 = vpow.pop %v1092
        %v1094 = vmul.f32 %v1061, 1.442695
        %v1095 = vpow.pop %v1094
        %v1096 = vmul.f32 %v1062, 1.442695
        %v1097 = vpow.pop %v1096
        %v1098 = vmul.f32 %v1063, 1.442695
        %v1099 = vpow.pop %v1098
        %v1100 = vmul.f32 %v1064, 1.442695
        %v1101 = vpow.pop %v1100
        %v1102 = vmul.f32 %v1065, 1.442695
        %v1103 = vpow.pop %v1102
        %v1104 = vmul.f32 %v1066, 1.442695
        %v1105 = vpow.pop %v1104
        %v1106 = vmul.f32 %v1067, 1.442695
        %v1107 = vpow.pop %v1106
        %v1108 = vmul.f32 %v1068, 1.442695
        %v1109 = vpow.pop %v1108
        %v1110 = vmul.f32 %v1069, 1.442695
        %v1111 = vpow.pop %v1110
        %v1112 = vmul.f32 %v1070, 1.442695
        %v1113 = vpow.pop %v1112
        %v1114 = vmul.f32 %v1071, 1.442695
        %v1115 = vpow.pop %v1114
        %v1116 = vmul.f32 %v1072, 1.442695
        %v1117 = vpow.pop %v1116
        %v1118 = vmul.f32 %v1073, 1.442695
        %v1119 = vpow.pop %v1118
        %v1120 = vmul.f32 %v1074, 1.442695
        %v1121 = vpow.pop %v1120
        %v1122 = vmul.f32 %v1075, 1.442695
        %v1123 = vpow.pop %v1122
        %v1124 = vmul.f32 %v1076, 1.442695
        %v1125 = vpow.pop %v1124
        %v1126 = vmul.f32 %v1077, 1.442695
        %v1127 = vpow.pop %v1126
        %v1128 = vmul.f32 %v1078, 1.442695
        %v1129 = vpow.pop %v1128
        %v1130 = vmul.f32 %v1079, 1.442695
        %v1131 = vpow.pop %v1130
        %v1132 = vmul.f32 %v1080, 1.442695
        %v1133 = vpow.pop %v1132
        %v1134 = vmul.f32 %v1081, 1.442695
        %v1135 = vpow.pop %v1134
        %v1136 = vmul.f32 %v1082, 1.442695
        %v1137 = vpow.pop %v1136
        %v1138 = vmul.f32 %v1083, 1.442695
        %v1139 = vpow.pop %v1138
        %v1140 = vmul.f32 %v1084, 1.442695
        %v1141 = vpow.pop %v1140
        %v1142 = vmul.f32 %v1085, 1.442695
        %v1143 = vpow.pop %v1142
        %v1144 = vmul.f32 %v1086, 1.442695
        %v1145 = vpow.pop %v1144
        %v1146 = vmul.f32 %v1087, 1.442695
        %v1147 = vpow.pop %v1146
        %v1148 = vmul.f32 %v1088, 1.442695
        %v1149 = vpow.pop %v1148
        %v1150 = vmul.f32 %v1089, 1.442695
        %v1151 = vpow.pop %v1150
        %v1152 = vmul.f32 %v1090, 1.442695
        %v1153 = vpow.pop %v1152
        %v1154 = vmul.f32 %v1091, 1.442695
        %v1155 = vpow.pop %v1154
        %1156 = vadd.xlane.f32.xlu0 %v1093
        %v1157 = vpop.xlane.xlu0 %1156
        %1158 = vadd.xlane.f32.xlu0 %v1095
        %v1159 = vpop.xlane.xlu0 %1158
        %1160 = vadd.xlane.f32.xlu0 %v1097
        %v1161 = vpop.xlane.xlu0 %1160
        %1162 = vadd.xlane.f32.xlu0 %v1099
        %v1163 = vpop.xlane.xlu0 %1162
        %1164 = vadd.xlane.f32.xlu0 %v1101
        %v1165 = vpop.xlane.xlu0 %1164
        %1166 = vadd.xlane.f32.xlu0 %v1103
        %v1167 = vpop.xlane.xlu0 %1166
        %1168 = vadd.xlane.f32.xlu0 %v1105
        %v1169 = vpop.xlane.xlu0 %1168
        %1170 = vadd.xlane.f32.xlu0 %v1107
        %v1171 = vpop.xlane.xlu0 %1170
        %1172 = vadd.xlane.f32.xlu0 %v1109
        %v1173 = vpop.xlane.xlu0 %1172
        %1174 = vadd.xlane.f32.xlu0 %v1111
        %v1175 = vpop.xlane.xlu0 %1174
        %1176 = vadd.xlane.f32.xlu0 %v1113
        %v1177 = vpop.xlane.xlu0 %1176
        %1178 = vadd.xlane.f32.xlu0 %v1115
        %v1179 = vpop.xlane.xlu0 %1178
        %1180 = vadd.xlane.f32.xlu0 %v1117
        %v1181 = vpop.xlane.xlu0 %1180
        %1182 = vadd.xlane.f32.xlu0 %v1119
        %v1183 = vpop.xlane.xlu0 %1182
        %1184 = vadd.xlane.f32.xlu0 %v1121
        %v1185 = vpop.xlane.xlu0 %1184
        %1186 = vadd.xlane.f32.xlu0 %v1123
        %v1187 = vpop.xlane.xlu0 %1186
        %1188 = vadd.xlane.f32.xlu0 %v1125
        %v1189 = vpop.xlane.xlu0 %1188
        %1190 = vadd.xlane.f32.xlu0 %v1127
        %v1191 = vpop.xlane.xlu0 %1190
        %1192 = vadd.xlane.f32.xlu0 %v1129
        %v1193 = vpop.xlane.xlu0 %1192
        %1194 = vadd.xlane.f32.xlu0 %v1131
        %v1195 = vpop.xlane.xlu0 %1194
        %1196 = vadd.xlane.f32.xlu0 %v1133
        %v1197 = vpop.xlane.xlu0 %1196
        %1198 = vadd.xlane.f32.xlu0 %v1135
        %v1199 = vpop.xlane.xlu0 %1198
        %1200 = vadd.xlane.f32.xlu0 %v1137
        %v1201 = vpop.xlane.xlu0 %1200
        %1202 = vadd.xlane.f32.xlu0 %v1139
        %v1203 = vpop.xlane.xlu0 %1202
        %1204 = vadd.xlane.f32.xlu0 %v1141
        %v1205 = vpop.xlane.xlu0 %1204
        %1206 = vadd.xlane.f32.xlu0 %v1143
        %v1207 = vpop.xlane.xlu0 %1206
        %1208 = vadd.xlane.f32.xlu0 %v1145
        %v1209 = vpop.xlane.xlu0 %1208
        %1210 = vadd.xlane.f32.xlu0 %v1147
        %v1211 = vpop.xlane.xlu0 %1210
        %1212 = vadd.xlane.f32.xlu0 %v1149
        %v1213 = vpop.xlane.xlu0 %1212
        %1214 = vadd.xlane.f32.xlu0 %v1151
        %v1215 = vpop.xlane.xlu0 %1214
        %1216 = vadd.xlane.f32.xlu0 %v1153
        %v1217 = vpop.xlane.xlu0 %1216
        %1218 = vadd.xlane.f32.xlu0 %v1155
        %v1219 = vpop.xlane.xlu0 %1218
        %v1220 = vrcp.pop %v1157
        %v1221 = vrcp.pop %v1159
        %v1222 = vrcp.pop %v1161
        %v1223 = vrcp.pop %v1163
        %v1224 = vrcp.pop %v1165
        %v1225 = vrcp.pop %v1167
        %v1226 = vrcp.pop %v1169
        %v1227 = vrcp.pop %v1171
        %v1228 = vrcp.pop %v1173
        %v1229 = vrcp.pop %v1175
        %v1230 = vrcp.pop %v1177
        %v1231 = vrcp.pop %v1179
        %v1232 = vrcp.pop %v1181
        %v1233 = vrcp.pop %v1183
        %v1234 = vrcp.pop %v1185
        %v1235 = vrcp.pop %v1187
        %v1236 = vrcp.pop %v1189
        %v1237 = vrcp.pop %v1191
        %v1238 = vrcp.pop %v1193
        %v1239 = vrcp.pop %v1195
        %v1240 = vrcp.pop %v1197
        %v1241 = vrcp.pop %v1199
        %v1242 = vrcp.pop %v1201
        %v1243 = vrcp.pop %v1203
        %v1244 = vrcp.pop %v1205
        %v1245 = vrcp.pop %v1207
        %v1246 = vrcp.pop %v1209
        %v1247 = vrcp.pop %v1211
        %v1248 = vrcp.pop %v1213
        %v1249 = vrcp.pop %v1215
        %v1250 = vrcp.pop %v1217
        %v1251 = vrcp.pop %v1219
        %v1252 = vmul.f32 %v1093, %v1220
        %v1253 = vmul.f32 %v1095, %v1221
        %v1254 = vmul.f32 %v1097, %v1222
        %v1255 = vmul.f32 %v1099, %v1223
        %v1256 = vmul.f32 %v1101, %v1224
        %v1257 = vmul.f32 %v1103, %v1225
        %v1258 = vmul.f32 %v1105, %v1226
        %v1259 = vmul.f32 %v1107, %v1227
        %v1260 = vmul.f32 %v1109, %v1228
        %v1261 = vmul.f32 %v1111, %v1229
        %v1262 = vmul.f32 %v1113, %v1230
        %v1263 = vmul.f32 %v1115, %v1231
        %v1264 = vmul.f32 %v1117, %v1232
        %v1265 = vmul.f32 %v1119, %v1233
        %v1266 = vmul.f32 %v1121, %v1234
        %v1267 = vmul.f32 %v1123, %v1235
        %v1268 = vmul.f32 %v1125, %v1236
        %v1269 = vmul.f32 %v1127, %v1237
        %v1270 = vmul.f32 %v1129, %v1238
        %v1271 = vmul.f32 %v1131, %v1239
        %v1272 = vmul.f32 %v1133, %v1240
        %v1273 = vmul.f32 %v1135, %v1241
        %v1274 = vmul.f32 %v1137, %v1242
        %v1275 = vmul.f32 %v1139, %v1243
        %v1276 = vmul.f32 %v1141, %v1244
        %v1277 = vmul.f32 %v1143, %v1245
        %v1278 = vmul.f32 %v1145, %v1246
        %v1279 = vmul.f32 %v1147, %v1247
        %v1280 = vmul.f32 %v1149, %v1248
        %v1281 = vmul.f32 %v1151, %v1249
        %v1282 = vmul.f32 %v1153, %v1250
        %v1283 = vmul.f32 %v1155, %v1251
        %1284 = vst [vmem:[%s272] sm:$0xff] %v1252
        %1285 = vst [vmem:[%s272 + $0x8] sm:$0xff] %v1253
        %1286 = vst [vmem:[%s272 + $0x10] sm:$0xff] %v1254
        %1287 = vst [vmem:[%s272 + $0x18] sm:$0xff] %v1255
        %1288 = vst [vmem:[%s272 + $0x20] sm:$0xff] %v1256
        %1289 = vst [vmem:[%s272 + $0x28] sm:$0xff] %v1257
        %1290 = vst [vmem:[%s272 + $0x30] sm:$0xff] %v1258
        %1291 = vst [vmem:[%s272 + $0x38] sm:$0xff] %v1259
        %1292 = vst [vmem:[%s272 + $0x40] sm:$0xff] %v1260
        %1293 = vst [vmem:[%s272 + $0x48] sm:$0xff] %v1261
        %1294 = vst [vmem:[%s272 + $0x50] sm:$0xff] %v1262
        %1295 = vst [vmem:[%s272 + $0x58] sm:$0xff] %v1263
        %1296 = vst [vmem:[%s272 + $0x60] sm:$0xff] %v1264
        %1297 = vst [vmem:[%s272 + $0x68] sm:$0xff] %v1265
        %1298 = vst [vmem:[%s272 + $0x70] sm:$0xff] %v1266
        %1299 = vst [vmem:[%s272 + $0x78] sm:$0xff] %v1267
        %1300 = vst [vmem:[%s272 + $0x80] sm:$0xff] %v1268
        %1301 = vst [vmem:[%s272 + $0x88] sm:$0xff] %v1269
        %1302 = vst [vmem:[%s272 + $0x90] sm:$0xff] %v1270
        %1303 = vst [vmem:[%s272 + $0x98] sm:$0xff] %v1271
        %1304 = vst [vmem:[%s272 + $0xa0] sm:$0xff] %v1272
        %1305 = vst [vmem:[%s272 + $0xa8] sm:$0xff] %v1273
        %1306 = vst [vmem:[%s272 + $0xb0] sm:$0xff] %v1274
        %1307 = vst [vmem:[%s272 + $0xb8] sm:$0xff] %v1275
        %1308 = vst [vmem:[%s272 + $0xc0] sm:$0xff] %v1276
        %1309 = vst [vmem:[%s272 + $0xc8] sm:$0xff] %v1277
        %1310 = vst [vmem:[%s272 + $0xd0] sm:$0xff] %v1278
        %1311 = vst [vmem:[%s272 + $0xd8] sm:$0xff] %v1279
        %1312 = vst [vmem:[%s272 + $0xe0] sm:$0xff] %v1280
        %1313 = vst [vmem:[%s272 + $0xe8] sm:$0xff] %v1281
        %1314 = vst [vmem:[%s272 + $0xf0] sm:$0xff] %v1282
        %1315 = vst [vmem:[%s272 + $0xf8] sm:$0xff] %v1283
        %s1316 = sand.u32 %s181, 1
        %s1317 = scalar_lea.sflag [#allocation3], %s1316
        %s1318 = sand.u32 %s181, 1
        %s1319 = smul.addr %s1318, 256
        %s1320 = scalar_lea.vmem [#allocation2], %s1319
        // Predicated region
        $region49: #{tpu_custom_call.1} parent=47 // pred_check
          %p1321 = pneg %p191
        $region50: #{tpu_custom_call.1} parent=47 // pred_check_branch
          %1323 = sbr.rel (%p1321) target = $region52
        $region51: #{tpu_custom_call.1} parent=47 // pred_region
          %s1324 = smul.u32 32, %s21
          %1326 = vsyncadd %s1317, 0
          %s1327 = smul.addr %s1324, 8
          %s1328 = scalar_lea.hbm %s7, %s1327
          %s1329 = sshll.u32 %s1320, 4
          %s1330 = int_to_ptr.vmem [resolvable:$true] %s1329
          %s1331 = sshll.u32 %s1328, 4
          %s1332 = int_to_ptr.hbm [resolvable:$true] %s1331
          %1337 = dma.vmem_to_hbm [thread:$0]  %s1330, 4096, %s1332, %s1317, 128, 128, 8
        $region52: #{tpu_custom_call.1} parent=47 // pred_fallthru
          _
      $region48: #{tpu_custom_call.1} parent=5 // pred_fallthru
        _
      %p1338 = scmp.le.s32.totalorder 2, %s16
      // Predicated region
      $region53: #{tpu_custom_call.1} parent=5 // pred_check
        %p1339 = pneg %p1338
      $region54: #{tpu_custom_call.1} parent=5 // pred_check_branch
        %1341 = sbr.rel (%p1339) target = $region56
      $region55: #{tpu_custom_call.1} parent=5 // pred_region
        %s1342 = ssub.s32 %s16, 2
        // Predicated region
        $region57: #{tpu_custom_call.1} parent=55 // pred_check
          %p1343 = pneg %p197
        $region58: #{tpu_custom_call.1} parent=55 // pred_check_branch
          %1345 = sbr.rel (%p1343) target = $region60
        $region59: #{tpu_custom_call.1} parent=55 // pred_region
          %s1346 = sand.u32 %s182, 1
          %s1347 = scalar_lea.sflag [#allocation3], %s1346
          %s1348 = sand.u32 %s182, 1
          %s1349 = smul.addr %s1348, 256
          %s1350 = scalar_lea.vmem [#allocation2], %s1349
          %1352 = dma.done %s1347, 4096
        $region60: #{tpu_custom_call.1} parent=55 // pred_fallthru
          _
      $region56: #{tpu_custom_call.1} parent=5 // pred_fallthru
        _
    $region6: #{tpu_custom_call.1} parent=1 // loop_footer
      %s20 = sadd.s32 1, %s16
    $region7: #{tpu_custom_call.1} parent=1 // loop_footer_branch
      %15 = sbr.rel target = $region3
    $region8: #{tpu_custom_call.1} parent=1 // loop_exit
      _
    %1353 = vsyncpa [#allocation3], 1
    %s1354 = scalar_lea.sflag [#allocation3], 1
    %1355 = vsyncpa %s1354, 1

</llo_original>
